<compile_context>
chip_gen: v5e
topology: v5e:2x2
jax: 0.10.0
libtpu: 0.0.40
codegen_flags: <defaults>
</compile_context>

<pallas_src>
import functools
import math

import jax
import jax.numpy as jnp
from jax.experimental import pallas as pl
from jax.experimental.pallas import tpu as pltpu

_MIB = 1024 * 1024


def _round_up(x, m):
    return ((x + m - 1) // m) * m


def _scale_dot_attn_kernel(klen_ref, q_ref, k_ref, v_ref, out_ref, attn_ref,
                           *, inv_temperature):
    """One BN-tile of ScaleDotAttention.

    klen_ref : (B, 1)       int32
    q_ref    : (B, Dk)      bf16 (or f32)
    k_ref    : (B, T, Dk)   bf16 (or f32)
    v_ref    : (B, T, Dv)   bf16 (or f32)
    out_ref  : (B, Dv_out)  Dv_out = round_up(Dv, 128)
    attn_ref : (B, T_out)   T_out  = round_up(T, 128)
    """
    q = q_ref[...].astype(jnp.float32)                     # (B, Dk)
    k = k_ref[...].astype(jnp.float32)                     # (B, T, Dk)
    v = v_ref[...].astype(jnp.float32)                     # (B, T, Dv)
    klen = klen_ref[...]                                   # (B, 1) int32

    # energy = bmm(q.unsqueeze(1), k.transpose(1, 2)).squeeze(1) -> (B, T)
    # TODO(synk): if a bundle trace on v6e/v7x shows the XLU (cross-lane reduce
    # + T relayouts) rather than HBM as the saturating slot, move these two
    # contractions to a batched lax.dot_general on the otherwise-idle MXU.
    energy = jnp.sum(q[:, None, :] * k, axis=-1)           # (B, T) f32

    # attn = softmax(energy / temperature, masked_fill(mask, -inf))
    e = energy * inv_temperature
    pos = jax.lax.broadcasted_iota(jnp.int32, e.shape, 1)  # (B, T)
    # -1e30 instead of -inf: exp underflows to exactly 0 for masked positions
    # (matches masked_fill(-inf)) without NaN for fully-masked rows.
    e = jnp.where(pos >= klen, -1e30, e)

    e_max = jnp.max(e, axis=-1, keepdims=True)
    p = jnp.exp(e - e_max)
    attn = p * pl.reciprocal(jnp.sum(p, axis=-1, keepdims=True), approx=True)

    # output = bmm(attn.unsqueeze(1), v).squeeze(1) -> (B, Dv)
    out = jnp.sum(attn[:, :, None] * v, axis=1)            # (B, Dv) f32

    # Lane-dense stores: zero-fill up to the 128-aligned output widths.
    b = out.shape[0]
    dv, dv_out = out.shape[1], out_ref.shape[1]
    if dv_out > dv:
        out = jnp.concatenate(
            [out, jnp.zeros((b, dv_out - dv), jnp.float32)], axis=-1)
    t, t_out = attn.shape[1], attn_ref.shape[1]
    if t_out > t:
        attn = jnp.concatenate(
            [attn, jnp.zeros((b, t_out - t), jnp.float32)], axis=-1)

    out_ref[...] = out.astype(out_ref.dtype)
    attn_ref[...] = attn.astype(attn_ref.dtype)


def _vmem_capacity_bytes():
    """Per-TensorCore VMEM capacity (trace-time query, conservative fallback)."""
    try:
        info = pltpu.get_tpu_info()
        cap = getattr(info, "vmem_capacity_bytes", None)
        if cap:
            return int(cap)
    except Exception:
        pass
    return 64 * _MIB                   # conservative: v7x per-TC VMEM


def _choose_bn_block(BN, T, Dk, Dv, T_attn, Dv_out,
                     kv_itemsize, q_itemsize, out_itemsize, budget_bytes):
    """Largest BN tile (multiple of 8) whose VMEM working set fits the budget,
    capped so the grid keeps >= ~4 steps when BN is large enough."""
    dk_p = _round_up(Dk, 128)          # minor dim is lane-padded to 128
    dv_p = _round_up(Dv, 128)
    t_p = _round_up(T, 8)              # second-minor dim is sublane-padded to 8

    # Double-buffered pipeline blocks (bytes per BN row).
    dma = 2 * (t_p * dk_p * kv_itemsize            # k
               + t_p * dv_p * kv_itemsize          # v
               + dk_p * q_itemsize                 # q
               + 128 * 4                           # k_len column (lane padded)
               + Dv_out * out_itemsize             # out  (already 128-aligned)
               + T_attn * out_itemsize)            # attn (already 128-aligned)
    # f32 temporaries materialized in the body (single copy each).
    tmp = 4 * (t_p * dk_p                          # q[:,None,:] * k product
               + t_p * dv_p                        # attn[:,:,None] * v product
               + 4 * _round_up(T, 128))            # energy / masked / p / attn
    per_row = dma + tmp

    blk = int(budget_bytes // max(per_row, 1))
    # Keep >= ~4 grid steps (>= 2x v7x TensorCores) so the pipeline overlaps
    # DMA with compute; per-step overhead (~0.35us) is negligible at MB blocks.
    blk = min(blk, max(8, (BN // 4) // 8 * 8), 1024)
    blk = max(8, (blk // 8) * 8)
    return blk


def scale_dot_attention(q, k, v, k_len, *, temperature, num_head,
                        stream_dtype=jnp.bfloat16):
    """Pallas ScaleDotAttention.forward (mask built in-kernel from k_len).

    Returns (output (BN, Dv), attn (bs, num_head, T))."""
    BN, T, Dk = k.shape
    Dv = v.shape[-1]
    bs = BN // num_head
    assert q.shape == (BN, Dk)
    assert k_len.shape == (bs,)
    out_dtype = q.dtype

    # Per-(batch*head)-row key length -> tiny (BN, 1) int32 column.
    klen_rows = jnp.repeat(k_len.astype(jnp.int32), num_head).reshape(BN, 1)

    # Stream q/k/v as bf16 (upcast to f32 in-kernel): halves the dominant HBM
    # read stream; accumulation stays f32.
    if stream_dtype is not None:
        q_s = q.astype(stream_dtype)
        k_s = k.astype(stream_dtype)
        v_s = v.astype(stream_dtype)
    else:
        q_s, k_s, v_s = q, k, v

    # Lane-dense output widths (multiples of 128); zero-filled in-kernel and
    # sliced off below.  k/v inputs stay unpadded (no extra HBM read traffic).
    T_attn = _round_up(T, 128)
    Dv_out = _round_up(Dv, 128)

    # Generation-aware VMEM budgeting: v7x has only 64 MiB per TensorCore.
    cap = _vmem_capacity_bytes()
    if cap <= 64 * _MIB:                          # v7x
        budget, vmem_limit = 20 * _MIB, 48 * _MIB
    else:                                         # v5e / v6e (128 MiB)
        budget, vmem_limit = 48 * _MIB, 96 * _MIB

    bn_blk = _choose_bn_block(
        BN, T, Dk, Dv, T_attn, Dv_out,
        kv_itemsize=jnp.dtype(k_s.dtype).itemsize,
        q_itemsize=jnp.dtype(q_s.dtype).itemsize,
        out_itemsize=jnp.dtype(out_dtype).itemsize,
        budget_bytes=budget)

    # Pad BN so the grid divides evenly (no clamped partial last block).
    BN_pad = _round_up(BN, bn_blk)
    if BN_pad != BN:
        pad = BN_pad - BN
        q_s = jnp.pad(q_s, ((0, pad), (0, 0)))
        k_s = jnp.pad(k_s, ((0, pad), (0, 0), (0, 0)))
        v_s = jnp.pad(v_s, ((0, pad), (0, 0), (0, 0)))
        klen_rows = jnp.pad(klen_rows, ((0, pad), (0, 0)))

    grid = (BN_pad // bn_blk,)

    kernel = functools.partial(_scale_dot_attn_kernel,
                               inv_temperature=float(1.0 / temperature))

    # TODO(synk): for very long T, add an inner "arbitrary" T axis with online
    # softmax so the K/V VMEM footprint is decoupled from sequence length.
    out, attn = pl.pallas_call(
        kernel,
        out_shape=(
            jax.ShapeDtypeStruct((BN_pad, Dv_out), out_dtype),
            jax.ShapeDtypeStruct((BN_pad, T_attn), out_dtype),
        ),
        grid=grid,
        in_specs=[
            pl.BlockSpec((bn_blk, 1), lambda b: (b, 0)),           # k_len rows
            pl.BlockSpec((bn_blk, Dk), lambda b: (b, 0)),          # q
            pl.BlockSpec((bn_blk, T, Dk), lambda b: (b, 0, 0)),    # k
            pl.BlockSpec((bn_blk, T, Dv), lambda b: (b, 0, 0)),    # v
        ],
        out_specs=(
            pl.BlockSpec((bn_blk, Dv_out), lambda b: (b, 0)),
            pl.BlockSpec((bn_blk, T_attn), lambda b: (b, 0)),
        ),
        compiler_params=pltpu.CompilerParams(
            dimension_semantics=("parallel",),      # megacore-shard BN on v7x
            vmem_limit_bytes=vmem_limit,
        ),
    )(klen_rows, q_s, k_s, v_s)

    out = out[:BN, :Dv]
    attn = attn[:BN, :T].reshape(-1, num_head, T)   # attn.view(-1, num_head, ts)
    return out, attn


def _reference(q, k, v, k_len, temperature, num_head):
    BN, T, _ = k.shape
    mask = jnp.arange(T)[None, :] >= jnp.repeat(k_len, num_head)[:, None]
    energy = jnp.einsum('bd,btd->bt', q, k) / temperature
    e = jnp.where(mask, -jnp.inf, energy)
    attn = jax.nn.softmax(e, axis=-1)
    out = jnp.einsum('bt,btd->bd', attn, v)
    return out, attn


if __name__ == "__main__":
    bs, num_head, ts, dk, dv = 2, 4, 8, 32, 32
    BN = bs * num_head
    temperature = math.sqrt(dk)

    key = jax.random.PRNGKey(0)
    kq, kk, kv = jax.random.split(key, 3)
    q = jax.random.normal(kq, (BN, dk), dtype=jnp.float32)
    k = jax.random.normal(kk, (BN, ts, dk), dtype=jnp.float32)
    v = jax.random.normal(kv, (BN, ts, dv), dtype=jnp.float32)
    k_len = jnp.array([ts, 5], dtype=jnp.int32)    # per-batch key lengths

    out, attn = scale_dot_attention(q, k, v, k_len,
                                    temperature=temperature,
                                    num_head=num_head)
    jax.block_until_ready((out, attn))

    # Reference uses the same bf16-rounded inputs the kernel streams, so the
    # comparison isolates kernel correctness from the bf16 input cast.
    q_r = q.astype(jnp.bfloat16).astype(jnp.float32)
    k_r = k.astype(jnp.bfloat16).astype(jnp.float32)
    v_r = v.astype(jnp.bfloat16).astype(jnp.float32)
    ref_out, ref_attn = _reference(q_r, k_r, v_r, k_len, temperature, num_head)

    assert out.shape == (BN, dv)
    assert attn.shape == (bs, num_head, ts)
    assert jnp.allclose(out, ref_out, atol=5e-3, rtol=5e-3), \
        float(jnp.max(jnp.abs(out - ref_out)))
    assert jnp.allclose(attn.reshape(BN, ts), ref_attn, atol=5e-3, rtol=5e-3), \
        float(jnp.max(jnp.abs(attn.reshape(BN, ts) - ref_attn)))

    print("KERNEL_OK")
</pallas_src>

<mosaic_0001>
module attributes {stable_mosaic.version = 11 : i64} {
  func.func @_scale_dot_attn_kernel(%arg0: i32, %arg1: memref<8x1xi32, #tpu.memory_space<vmem>>, %arg2: memref<8x32xbf16, #tpu.memory_space<vmem>>, %arg3: memref<8x8x32xbf16, #tpu.memory_space<vmem>>, %arg4: memref<8x8x32xbf16, #tpu.memory_space<vmem>>, %arg5: memref<8x128xf32, #tpu.memory_space<vmem>>, %arg6: memref<8x128xf32, #tpu.memory_space<vmem>>) attributes {dimension_semantics = [#tpu.dimension_semantics<parallel>], iteration_bounds = array<i64: 1>, scalar_prefetch = 0 : i64, scratch_operands = 0 : i64, tpu.core_type = #tpu.core_type<tc>, window_params = [{transform_indices = @transform_0, window_bounds = array<i64: 8, 1>}, {transform_indices = @transform_1, window_bounds = array<i64: 8, 32>}, {transform_indices = @transform_2, window_bounds = array<i64: 8, 8, 32>}, {transform_indices = @transform_3, window_bounds = array<i64: 8, 8, 32>}, {transform_indices = @transform_4, window_bounds = array<i64: 8, 128>}, {transform_indices = @transform_5, window_bounds = array<i64: 8, 128>}]} {
    %c0 = arith.constant 0 : index
    %c0_0 = arith.constant 0 : index
    %0 = vector.load %arg2[%c0, %c0_0] : memref<8x32xbf16, #tpu.memory_space<vmem>>, vector<8x32xbf16>
    %1 = arith.extf %0 : vector<8x32xbf16> to vector<8x32xf32>
    %c0_1 = arith.constant 0 : index
    %c0_2 = arith.constant 0 : index
    %c0_3 = arith.constant 0 : index
    %2 = vector.load %arg3[%c0_1, %c0_2, %c0_3] : memref<8x8x32xbf16, #tpu.memory_space<vmem>>, vector<8x8x32xbf16>
    %3 = arith.extf %2 : vector<8x8x32xbf16> to vector<8x8x32xf32>
    %c0_4 = arith.constant 0 : index
    %c0_5 = arith.constant 0 : index
    %c0_6 = arith.constant 0 : index
    %4 = vector.load %arg4[%c0_4, %c0_5, %c0_6] : memref<8x8x32xbf16, #tpu.memory_space<vmem>>, vector<8x8x32xbf16>
    %5 = arith.extf %4 : vector<8x8x32xbf16> to vector<8x8x32xf32>
    %c0_7 = arith.constant 0 : index
    %c0_8 = arith.constant 0 : index
    %6 = vector.load %arg1[%c0_7, %c0_8] : memref<8x1xi32, #tpu.memory_space<vmem>>, vector<8x1xi32>
    %7 = vector.shape_cast %1 : vector<8x32xf32> to vector<8x1x32xf32>
    %8 = vector.broadcast %7 : vector<8x1x32xf32> to vector<8x8x32xf32>
    %9 = arith.mulf %8, %3 : vector<8x8x32xf32>
    %cst = arith.constant dense<0.000000e+00> : vector<8x8xf32>
    %10 = vector.multi_reduction <add>, %9, %cst [2] : vector<8x8x32xf32> to vector<8x8xf32>
    %cst_9 = arith.constant 0.176776692 : f32
    %11 = vector.broadcast %cst_9 : f32 to vector<8x8xf32>
    %12 = arith.mulf %10, %11 : vector<8x8xf32>
    %13 = tpu.iota {dimensions = array<i32: 1>} : vector<8x8xi32>
    %14 = vector.broadcast %6 : vector<8x1xi32> to vector<8x8xi32>
    %15 = arith.cmpi sge, %13, %14 : vector<8x8xi32>
    %cst_10 = arith.constant -1.000000e+30 : f32
    %16 = vector.broadcast %cst_10 : f32 to vector<8x8xf32>
    %17 = arith.select %15, %16, %12 : vector<8x8xi1>, vector<8x8xf32>
    %cst_11 = arith.constant dense<0xFF800000> : vector<8xf32>
    %18 = vector.multi_reduction <maximumf>, %17, %cst_11 [1] : vector<8x8xf32> to vector<8xf32>
    %19 = vector.shape_cast %18 : vector<8xf32> to vector<8x1xf32>
    %20 = vector.broadcast %19 : vector<8x1xf32> to vector<8x8xf32>
    %21 = arith.subf %17, %20 : vector<8x8xf32>
    %22 = math.exp %21 : vector<8x8xf32>
    %cst_12 = arith.constant dense<0.000000e+00> : vector<8xf32>
    %23 = vector.multi_reduction <add>, %22, %cst_12 [1] : vector<8x8xf32> to vector<8xf32>
    %24 = vector.shape_cast %23 : vector<8xf32> to vector<8x1xf32>
    %25 = tpu.reciprocal %24 {approx = true} : vector<8x1xf32> -> vector<8x1xf32>
    %26 = vector.broadcast %25 : vector<8x1xf32> to vector<8x8xf32>
    %27 = arith.mulf %22, %26 : vector<8x8xf32>
    %28 = vector.shape_cast %27 : vector<8x8xf32> to vector<8x8x1xf32>
    %29 = vector.broadcast %28 : vector<8x8x1xf32> to vector<8x8x32xf32>
    %30 = arith.mulf %29, %5 : vector<8x8x32xf32>
    %cst_13 = arith.constant dense<0.000000e+00> : vector<8x32xf32>
    %31 = vector.multi_reduction <add>, %30, %cst_13 [1] : vector<8x8x32xf32> to vector<8x32xf32>
    %cst_14 = arith.constant 0.000000e+00 : f32
    %32 = vector.broadcast %cst_14 : f32 to vector<8x96xf32>
    %33 = tpu.concatenate %31, %32 in 1 : vector<8x32xf32>, vector<8x96xf32> -> vector<8x128xf32>
    %cst_15 = arith.constant 0.000000e+00 : f32
    %34 = vector.broadcast %cst_15 : f32 to vector<8x120xf32>
    %35 = tpu.concatenate %27, %34 in 1 : vector<8x8xf32>, vector<8x120xf32> -> vector<8x128xf32>
    %c0_16 = arith.constant 0 : index
    %c0_17 = arith.constant 0 : index
    %36 = vector.load %arg5[%c0_16, %c0_17] : memref<8x128xf32, #tpu.memory_space<vmem>>, vector<8x128xf32>
    tpu.vector_store %arg5[%c0_16, %c0_17], %33 {strides = array<i32>} : memref<8x128xf32, #tpu.memory_space<vmem>>, vector<8x128xf32>,
    %c0_18 = arith.constant 0 : index
    %c0_19 = arith.constant 0 : index
    %37 = vector.load %arg6[%c0_18, %c0_19] : memref<8x128xf32, #tpu.memory_space<vmem>>, vector<8x128xf32>
    tpu.vector_store %arg6[%c0_18, %c0_19], %35 {strides = array<i32>} : memref<8x128xf32, #tpu.memory_space<vmem>>, vector<8x128xf32>,
    return
  }
  func.func @transform_0(%arg0: i32) -> (i32, i32) {
    %c0_i32 = arith.constant 0 : i32
    %c0_i32_0 = arith.constant 0 : i32
    return %arg0, %c0_i32 : i32, i32
  }
  func.func @transform_1(%arg0: i32) -> (i32, i32) {
    %c0_i32 = arith.constant 0 : i32
    %c0_i32_0 = arith.constant 0 : i32
    return %arg0, %c0_i32 : i32, i32
  }
  func.func @transform_2(%arg0: i32) -> (i32, i32, i32) {
    %c0_i32 = arith.constant 0 : i32
    %c0_i32_0 = arith.constant 0 : i32
    %c0_i32_1 = arith.constant 0 : i32
    return %arg0, %c0_i32, %c0_i32_0 : i32, i32, i32
  }
  func.func @transform_3(%arg0: i32) -> (i32, i32, i32) {
    %c0_i32 = arith.constant 0 : i32
    %c0_i32_0 = arith.constant 0 : i32
    %c0_i32_1 = arith.constant 0 : i32
    return %arg0, %c0_i32, %c0_i32_0 : i32, i32, i32
  }
  func.func @transform_4(%arg0: i32) -> (i32, i32) {
    %c0_i32 = arith.constant 0 : i32
    %c0_i32_0 = arith.constant 0 : i32
    return %arg0, %c0_i32 : i32, i32
  }
  func.func @transform_5(%arg0: i32) -> (i32, i32) {
    %c0_i32 = arith.constant 0 : i32
    %c0_i32_0 = arith.constant 0 : i32
    return %arg0, %c0_i32 : i32, i32
  }
}

</mosaic_0001>

<llo_original>
// kernel: tpu_custom_call.1
$region0: #{tpu_custom_call.1}
  #allocation0 [shape = 'u32[]', space=smem, size = 0x4, offset = 0x4, fixed_abs, tag = 'smem constant byte address 0x4 - core index']
  #allocation1 [shape = 'u32[72,128]{1,0:T(1,128)}', space=vmem, size = 0x9000, scoped, tag = 'internal scratch']
  %s0 = inlined_call_operand.vmem [shape: s32[8,1], index: 0, kind: input, shape index: {}]
  %s1 = inlined_call_operand.vmem [shape: bf16[8,32], index: 1, kind: input, shape index: {}]
  %s2 = inlined_call_operand.hbm [shape: bf16[8,8,32], index: 2, kind: input, shape index: {}]
  %s3 = inlined_call_operand.hbm [shape: bf16[8,8,32], index: 3, kind: input, shape index: {}]
  %s4 = inlined_call_operand.hbm [shape: f32[8,128], index: 4, kind: output, shape index: {0}]
  %s5 = inlined_call_operand.hbm [shape: f32[8,128], index: 5, kind: output, shape index: {1}]
  %6 = xla_tuple %s4, %s5
  %s7 = sld [smem:[#allocation0]]
  $region42: #{tpu_custom_call.1} parent=0
    _
  %s9 = ssub.s32 1, %s7
  %s10 = scalar_select 0, %s9, %s7
  $region1: #{tpu_custom_call.1} parent=0
    #allocation2 [shape = 'u8[16384]{0}', space=vmem, size = 0x4000, scoped, tag = 'input window, operand 2, single buffered']
    #allocation3 [shape = 's32[1]{0}', space=sflag, size = 0x4, scoped, tag = 'scoped memory for tpu_custom_call.1']
    #allocation4 [shape = 's32[1]{0}', space=sflag, size = 0x4, scoped, tag = 'scoped memory for tpu_custom_call.1']
    #allocation5 [shape = 'u8[16384]{0}', space=vmem, size = 0x4000, scoped, tag = 'input window, operand 3, single buffered']
    #allocation6 [shape = 's32[1]{0}', space=sflag, size = 0x4, scoped, tag = 'scoped memory for tpu_custom_call.1']
    #allocation7 [shape = 'u8[4096]{0}', space=vmem, size = 0x1000, scoped, tag = 'output window, operand 0, single buffered']
    #allocation8 [shape = 'u8[4096]{0}', space=vmem, size = 0x1000, scoped, tag = 'output window, operand 1, single buffered']
    #allocation9 [shape = 's32[1]{0}', space=sflag, size = 0x4, scoped, tag = 'scoped memory for tpu_custom_call.1']
    %11 = vsyncpa [#allocation3], 0
    %12 = vsyncpa [#allocation6], 0
    %13 = vsyncpa [#allocation4], 0
    %14 = vsyncpa [#allocation9], 0
    // Predicated region
    $region2: #{tpu_custom_call.1} parent=1 // pred_check
      _
    $region3: #{tpu_custom_call.1} parent=1 // pred_check_branch
      %16 = sbr.rel (0) target = $region5
    $region4: #{tpu_custom_call.1} parent=1 // pred_region
      _
    $region5: #{tpu_custom_call.1} parent=1 // pred_fallthru
      _
    // Predicated region
    $region6: #{tpu_custom_call.1} parent=1 // pred_check
      _
    $region7: #{tpu_custom_call.1} parent=1 // pred_check_branch
      %18 = sbr.rel (0) target = $region9
    $region8: #{tpu_custom_call.1} parent=1 // pred_region
      _
    $region9: #{tpu_custom_call.1} parent=1 // pred_fallthru
      _
    // Predicated region
    $region10: #{tpu_custom_call.1} parent=1 // pred_check
      _
    $region11: #{tpu_custom_call.1} parent=1 // pred_check_branch
      %20 = sbr.rel (0) target = $region13
    $region12: #{tpu_custom_call.1} parent=1 // pred_region
      %22 = vsyncadd [#allocation3], 0
      %s23 = sshll.u32 %s2, 4
      %s24 = int_to_ptr.hbm [resolvable:$true] %s23
      %s25 = sshll.u32 [#allocation2], 4
      %s26 = int_to_ptr.vmem [resolvable:$true] %s25
      %31 = dma.hbm_to_vmem [thread:$0]  %s24, 512, %s26, [#allocation3], 64, 64, 4
    $region13: #{tpu_custom_call.1} parent=1 // pred_fallthru
      _
    // Predicated region
    $region14: #{tpu_custom_call.1} parent=1 // pred_check
      _
    $region15: #{tpu_custom_call.1} parent=1 // pred_check_branch
      %33 = sbr.rel (0) target = $region17
    $region16: #{tpu_custom_call.1} parent=1 // pred_region
      %35 = vsyncadd [#allocation6], 0
      %s36 = sshll.u32 %s3, 4
      %s37 = int_to_ptr.hbm [resolvable:$true] %s36
      %s38 = sshll.u32 [#allocation5], 4
      %s39 = int_to_ptr.vmem [resolvable:$true] %s38
      %44 = dma.hbm_to_vmem [thread:$0]  %s37, 512, %s39, [#allocation6], 64, 64, 4
    $region17: #{tpu_custom_call.1} parent=1 // pred_fallthru
      _
    // Predicated region
    $region18: #{tpu_custom_call.1} parent=1 // pred_check
      _
    $region19: #{tpu_custom_call.1} parent=1 // pred_check_branch
      %46 = sbr.rel (0) target = $region21
    $region20: #{tpu_custom_call.1} parent=1 // pred_region
      %48 = dma.done [#allocation3], 512
    $region21: #{tpu_custom_call.1} parent=1 // pred_fallthru
      _
    // Predicated region
    $region22: #{tpu_custom_call.1} parent=1 // pred_check
      _
    $region23: #{tpu_custom_call.1} parent=1 // pred_check_branch
      %50 = sbr.rel (0) target = $region25
    $region24: #{tpu_custom_call.1} parent=1 // pred_region
      %52 = dma.done [#allocation6], 512
    $region25: #{tpu_custom_call.1} parent=1 // pred_fallthru
      _
    %v53 = vld [vmem:[%s1] sm:$0xf]
    %v54 = vunpack.c.l.bf16 %v53
    %v55 = vld [vmem:[#allocation2] sm:$0xf]
    %v56 = vld [vmem:[#allocation2 + $0x4] sm:$0xf]
    %v57 = vld [vmem:[#allocation2 + $0x8] sm:$0xf]
    %v58 = vld [vmem:[#allocation2 + $0xc] sm:$0xf]
    %v59 = vld [vmem:[#allocation2 + $0x10] sm:$0xf]
    %v60 = vld [vmem:[#allocation2 + $0x14] sm:$0xf]
    %v61 = vld [vmem:[#allocation2 + $0x18] sm:$0xf]
    %v62 = vld [vmem:[#allocation2 + $0x1c] sm:$0xf]
    %v63 = vunpack.c.l.bf16 %v55
    %v64 = vunpack.c.l.bf16 %v56
    %v65 = vunpack.c.l.bf16 %v57
    %v66 = vunpack.c.l.bf16 %v58
    %v67 = vunpack.c.l.bf16 %v59
    %v68 = vunpack.c.l.bf16 %v60
    %v69 = vunpack.c.l.bf16 %v61
    %v70 = vunpack.c.l.bf16 %v62
    %v71 = vld [vmem:[#allocation5] sm:$0xf]
    %v72 = vld [vmem:[#allocation5 + $0x4] sm:$0xf]
    %v73 = vld [vmem:[#allocation5 + $0x8] sm:$0xf]
    %v74 = vld [vmem:[#allocation5 + $0xc] sm:$0xf]
    %v75 = vld [vmem:[#allocation5 + $0x10] sm:$0xf]
    %v76 = vld [vmem:[#allocation5 + $0x14] sm:$0xf]
    %v77 = vld [vmem:[#allocation5 + $0x18] sm:$0xf]
    %v78 = vld [vmem:[#allocation5 + $0x1c] sm:$0xf]
    %v79 = vunpack.c.l.bf16 %v71
    %v80 = vunpack.c.l.bf16 %v72
    %v81 = vunpack.c.l.bf16 %v73
    %v82 = vunpack.c.l.bf16 %v74
    %v83 = vunpack.c.l.bf16 %v75
    %v84 = vunpack.c.l.bf16 %v76
    %v85 = vunpack.c.l.bf16 %v77
    %v86 = vunpack.c.l.bf16 %v78
    %v87 = vld [vmem:[%s0] sm:$0xff]
    %v89 = vrot.slane %v54, 1
    %v90 = vrot.slane %v54, 2
    %v91 = vrot.slane %v54, 3
    %v92 = vrot.slane %v54, 4
    %v93 = vrot.slane %v54, 5
    %v94 = vrot.slane %v54, 6
    %v95 = vrot.slane %v54, 7
    %v96 = vperm.slane %v54, 0
    %v97 = vperm.slane %v89, 0
    %v98 = vperm.slane %v90, 0
    %v99 = vperm.slane %v91, 0
    %v100 = vperm.slane %v92, 0
    %v101 = vperm.slane %v93, 0
    %v102 = vperm.slane %v94, 0
    %v103 = vperm.slane %v95, 0
    %v112 = vmul.f32 %v96, %v63
    %v113 = vmul.f32 %v97, %v64
    %v114 = vmul.f32 %v98, %v65
    %v115 = vmul.f32 %v99, %v66
    %v116 = vmul.f32 %v100, %v67
    %v117 = vmul.f32 %v101, %v68
    %v118 = vmul.f32 %v102, %v69
    %v119 = vmul.f32 %v103, %v70
    %vm120 = vcmask 261120
    %v121 = vsel %vm120, %v112, 0.0
    %122 = vadd.xlane.f32.xlu0 %v121
    %v123 = vpop.xlane.xlu0 %122
    %v124 = vsel %vm120, %v113, 0.0
    %125 = vadd.xlane.f32.xlu0 %v124
    %v126 = vpop.xlane.xlu0 %125
    %v127 = vsel %vm120, %v114, 0.0
    %128 = vadd.xlane.f32.xlu0 %v127
    %v129 = vpop.xlane.xlu0 %128
    %v130 = vsel %vm120, %v115, 0.0
    %131 = vadd.xlane.f32.xlu0 %v130
    %v132 = vpop.xlane.xlu0 %131
    %v133 = vsel %vm120, %v116, 0.0
    %134 = vadd.xlane.f32.xlu0 %v133
    %v135 = vpop.xlane.xlu0 %134
    %v136 = vsel %vm120, %v117, 0.0
    %137 = vadd.xlane.f32.xlu0 %v136
    %v138 = vpop.xlane.xlu0 %137
    %v139 = vsel %vm120, %v118, 0.0
    %140 = vadd.xlane.f32.xlu0 %v139
    %v141 = vpop.xlane.xlu0 %140
    %v142 = vsel %vm120, %v119, 0.0
    %143 = vadd.xlane.f32.xlu0 %v142
    %v144 = vpop.xlane.xlu0 %143
    %v145 = vmul.f32 %v123, 0.17677669
    %v146 = vmul.f32 %v126, 0.17677669
    %v147 = vmul.f32 %v129, 0.17677669
    %v148 = vmul.f32 %v132, 0.17677669
    %v149 = vmul.f32 %v135, 0.17677669
    %v150 = vmul.f32 %v138, 0.17677669
    %v151 = vmul.f32 %v141, 0.17677669
    %v152 = vmul.f32 %v144, 0.17677669
    %v153 = vlaneseq
    %v154 = vand.u32 %v153, 127
    %155 = vset.pattern.permute.xlu0 0
    %156 = vperm.xlu0 %155, %v87
    %v157 = vpop.permute.xlu0 %156
    %vm158 = vcmp.ge.s32.totalorder %v154, %v157
    %v167 = vperm.slane %v145, %v154
    %v168 = vperm.slane %v146, %v154
    %v169 = vperm.slane %v147, %v154
    %v170 = vperm.slane %v148, %v154
    %v171 = vperm.slane %v149, %v154
    %v172 = vperm.slane %v150, %v154
    %v173 = vperm.slane %v151, %v154
    %v174 = vperm.slane %v152, %v154
    %vm175 = vcmask 1041409
    %v176 = vsel %vm175, %v168, %v167
    %vm177 = vcmask 1042434
    %v178 = vsel %vm177, %v169, %v176
    %vm179 = vcmask 1043459
    %v180 = vsel %vm179, %v170, %v178
    %vm181 = vcmask 1044484
    %v182 = vsel %vm181, %v171, %v180
    %vm183 = vcmask 1045509
    %v184 = vsel %vm183, %v172, %v182
    %vm185 = vcmask 1046534
    %v186 = vsel %vm185, %v173, %v184
    %vm187 = vcmask 1047559
    %v188 = vsel %vm187, %v174, %v186
    %v190 = vsel %vm158, -1e+30, %v188
    %vm191 = vcmask 64512
    %v192 = vsel %vm191, %v190, -inf
    %193 = vmax.xlane.f32.xlu0 %v192
    %v194 = vpop.xlane.xlu0 %193
    %v195 = vsub.f32 %v190, %v194
    %v196 = vmul.f32 %v195, 1.442695
    %v197 = vpow.pop %v196
    %v198 = vsel %vm191, %v197, 0.0
    %199 = vadd.xlane.f32.xlu0 %v198
    %v200 = vpop.xlane.xlu0 %199
    %v201 = vrcp.pop %v200
    %v202 = vmul.f32 %v197, %v201
    %v203 = vperm.slane %v202, 0
    %v204 = vlaneseq
    %v205 = vshrl.u32 %v204, 7
    %207 = vset.pattern.permute.xlu0 %v205
    %208 = vperm.xlu0 %207, %v203
    %v209 = vpop.permute.xlu0 %208
    %v210 = vperm.slane %v202, 1
    %v211 = vlaneseq
    %v212 = vshrl.u32 %v211, 7
    %214 = vset.pattern.permute.xlu0 %v212
    %215 = vperm.xlu0 %214, %v210
    %v216 = vpop.permute.xlu0 %215
    %v217 = vperm.slane %v202, 2
    %v218 = vlaneseq
    %v219 = vshrl.u32 %v218, 7
    %221 = vset.pattern.permute.xlu0 %v219
    %222 = vperm.xlu0 %221, %v217
    %v223 = vpop.permute.xlu0 %222
    %v224 = vperm.slane %v202, 3
    %v225 = vlaneseq
    %v226 = vshrl.u32 %v225, 7
    %228 = vset.pattern.permute.xlu0 %v226
    %229 = vperm.xlu0 %228, %v224
    %v230 = vpop.permute.xlu0 %229
    %v231 = vperm.slane %v202, 4
    %v232 = vlaneseq
    %v233 = vshrl.u32 %v232, 7
    %235 = vset.pattern.permute.xlu0 %v233
    %236 = vperm.xlu0 %235, %v231
    %v237 = vpop.permute.xlu0 %236
    %v238 = vperm.slane %v202, 5
    %v239 = vlaneseq
    %v240 = vshrl.u32 %v239, 7
    %242 = vset.pattern.permute.xlu0 %v240
    %243 = vperm.xlu0 %242, %v238
    %v244 = vpop.permute.xlu0 %243
    %v245 = vperm.slane %v202, 6
    %v246 = vlaneseq
    %v247 = vshrl.u32 %v246, 7
    %249 = vset.pattern.permute.xlu0 %v247
    %250 = vperm.xlu0 %249, %v245
    %v251 = vpop.permute.xlu0 %250
    %v252 = vperm.slane %v202, 7
    %v253 = vlaneseq
    %v254 = vshrl.u32 %v253, 7
    %256 = vset.pattern.permute.xlu0 %v254
    %257 = vperm.xlu0 %256, %v252
    %v258 = vpop.permute.xlu0 %257
    %v259 = vmul.f32 %v209, %v79
    %v260 = vmul.f32 %v216, %v80
    %v261 = vmul.f32 %v223, %v81
    %v262 = vmul.f32 %v230, %v82
    %v263 = vmul.f32 %v237, %v83
    %v264 = vmul.f32 %v244, %v84
    %v265 = vmul.f32 %v251, %v85
    %v266 = vmul.f32 %v258, %v86
    %v267 = vsel %vm120, %v259, 0.0
    %v268 = vrot.slane %v267, 4
    %v269 = vadd.f32 %v267, %v268
    %v270 = vrot.slane %v269, 2
    %v271 = vadd.f32 %v269, %v270
    %v272 = vrot.slane %v271, 1
    %v273 = vadd.f32 %v271, %v272
    %v274 = vsel %vm120, %v260, 0.0
    %v275 = vrot.slane %v274, 4
    %v276 = vadd.f32 %v274, %v275
    %v277 = vrot.slane %v276, 2
    %v278 = vadd.f32 %v276, %v277
    %v279 = vrot.slane %v278, 1
    %v280 = vadd.f32 %v278, %v279
    %v281 = vsel %vm120, %v261, 0.0
    %v282 = vrot.slane %v281, 4
    %v283 = vadd.f32 %v281, %v282
    %v284 = vrot.slane %v283, 2
    %v285 = vadd.f32 %v283, %v284
    %v286 = vrot.slane %v285, 1
    %v287 = vadd.f32 %v285, %v286
    %v288 = vsel %vm120, %v262, 0.0
    %v289 = vrot.slane %v288, 4
    %v290 = vadd.f32 %v288, %v289
    %v291 = vrot.slane %v290, 2
    %v292 = vadd.f32 %v290, %v291
    %v293 = vrot.slane %v292, 1
    %v294 = vadd.f32 %v292, %v293
    %v295 = vsel %vm120, %v263, 0.0
    %v296 = vrot.slane %v295, 4
    %v297 = vadd.f32 %v295, %v296
    %v298 = vrot.slane %v297, 2
    %v299 = vadd.f32 %v297, %v298
    %v300 = vrot.slane %v299, 1
    %v301 = vadd.f32 %v299, %v300
    %v302 = vsel %vm120, %v264, 0.0
    %v303 = vrot.slane %v302, 4
    %v304 = vadd.f32 %v302, %v303
    %v305 = vrot.slane %v304, 2
    %v306 = vadd.f32 %v304, %v305
    %v307 = vrot.slane %v306, 1
    %v308 = vadd.f32 %v306, %v307
    %v309 = vsel %vm120, %v265, 0.0
    %v310 = vrot.slane %v309, 4
    %v311 = vadd.f32 %v309, %v310
    %v312 = vrot.slane %v311, 2
    %v313 = vadd.f32 %v311, %v312
    %v314 = vrot.slane %v313, 1
    %v315 = vadd.f32 %v313, %v314
    %v316 = vsel %vm120, %v266, 0.0
    %v317 = vrot.slane %v316, 4
    %v318 = vadd.f32 %v316, %v317
    %v319 = vrot.slane %v318, 2
    %v320 = vadd.f32 %v318, %v319
    %v321 = vrot.slane %v320, 1
    %v322 = vadd.f32 %v320, %v321
    %v331 = vsel %vm175, %v280, %v273
    %v332 = vsel %vm177, %v287, %v331
    %v333 = vsel %vm179, %v294, %v332
    %v334 = vsel %vm181, %v301, %v333
    %v335 = vsel %vm183, %v308, %v334
    %v336 = vsel %vm185, %v315, %v335
    %v337 = vsel %vm187, %v322, %v336
    %v339 = vsel %vm120, %v337, 0.0
    %v340 = vsel %vm191, %v202, 0.0
    %341 = vst [vmem:[#allocation7] sm:$0xff] %v339
    %342 = vst [vmem:[#allocation8] sm:$0xff] %v340
    // Predicated region
    $region26: #{tpu_custom_call.1} parent=1 // pred_check
      _
    $region27: #{tpu_custom_call.1} parent=1 // pred_check_branch
      %344 = sbr.rel (0) target = $region29
    $region28: #{tpu_custom_call.1} parent=1 // pred_region
      %346 = vsyncadd [#allocation4], 0
      %s348 = sshll.u32 [#allocation7], 4
      %s349 = int_to_ptr.vmem [resolvable:$true] %s348
      %s350 = sshll.u32 %s4, 4
      %s351 = int_to_ptr.hbm [resolvable:$true] %s350
      %353 = dma.vmem_to_hbm [thread:$0]  %s349, 128, %s351, [#allocation4]
    $region29: #{tpu_custom_call.1} parent=1 // pred_fallthru
      _
    // Predicated region
    $region30: #{tpu_custom_call.1} parent=1 // pred_check
      _
    $region31: #{tpu_custom_call.1} parent=1 // pred_check_branch
      %355 = sbr.rel (0) target = $region33
    $region32: #{tpu_custom_call.1} parent=1 // pred_region
      %357 = vsyncadd [#allocation9], 0
      %s359 = sshll.u32 [#allocation8], 4
      %s360 = int_to_ptr.vmem [resolvable:$true] %s359
      %s361 = sshll.u32 %s5, 4
      %s362 = int_to_ptr.hbm [resolvable:$true] %s361
      %364 = dma.vmem_to_hbm [thread:$0]  %s360, 128, %s362, [#allocation9]
    $region33: #{tpu_custom_call.1} parent=1 // pred_fallthru
      _
    // Predicated region
    $region34: #{tpu_custom_call.1} parent=1 // pred_check
      _
    $region35: #{tpu_custom_call.1} parent=1 // pred_check_branch
      %366 = sbr.rel (0) target = $region37
    $region36: #{tpu_custom_call.1} parent=1 // pred_region
      %368 = dma.done [#allocation4], 128
    $region37: #{tpu_custom_call.1} parent=1 // pred_fallthru
      _
    // Predicated region
    $region38: #{tpu_custom_call.1} parent=1 // pred_check
      _
    $region39: #{tpu_custom_call.1} parent=1 // pred_check_branch
      %370 = sbr.rel (0) target = $region41
    $region40: #{tpu_custom_call.1} parent=1 // pred_region
      %372 = dma.done [#allocation9], 128
    $region41: #{tpu_custom_call.1} parent=1 // pred_fallthru
      _
    %373 = vsyncpa [#allocation3], 1
    %374 = vsyncpa [#allocation6], 1
    %375 = vsyncpa [#allocation4], 1
    %376 = vsyncpa [#allocation9], 1

</llo_original>
